<compile_context>
chip_gen: v7x
topology: tpu7x:2x2x1
jax: 0.10.0
libtpu: 0.0.40
codegen_flags: <defaults>
</compile_context>

<pallas_src>
import jax
import jax.numpy as jnp
from jax.experimental import pallas as pl
from jax.experimental.pallas import tpu as pltpu

BN_EPS = 1e-5


def _round_up(x, m):
    return ((x + m - 1) // m) * m


def _make_kernel(true_count):
    """Kernel closure over the true (unpadded) per-channel element count."""
    inv_cnt = 1.0 / float(true_count)

    def kernel(w_ref, patch_ref, gamma_ref, beta_ref, o_ref, sum_ref, ssq_ref):
        # w_ref:     (C_out, 9*C_in)       weights, cols ordered (kh, kw, ci)
        # patch_ref: (1, 9*C_in, TS)       im2col tile (lane-dense, zero-padded)
        # gamma_ref: (C_out, 1)            BN weight
        # beta_ref:  (C_out, 1)            BN bias
        # o_ref:     (1, C_out, TS)        output tile (lane-dense)
        # sum_ref:   (C_out, 1) f32        persistent per-channel sum
        # ssq_ref:   (C_out, 1) f32        persistent per-channel sum of squares
        p = pl.program_id(0)   # pass: 0 = stats, 1 = apply
        n = pl.program_id(1)   # batch index
        t = pl.program_id(2)   # spatial tile index

        @pl.when((p == 0) & (n == 0) & (t == 0))
        def _init():
            sum_ref[...] = jnp.zeros_like(sum_ref)
            ssq_ref[...] = jnp.zeros_like(ssq_ref)

        # Single MXU dot per tile: (C_out, 9*C_in) @ (9*C_in, TS).  At tiny
        # channel counts this is push/drain latency only (MXU barely lit);
        # recomputing it in pass 1 is cheaper than an extra HBM round-trip.
        acc = jnp.dot(w_ref[...], patch_ref[0],
                      preferred_element_type=jnp.float32)      # (C_out, TS)

        @pl.when(p == 0)
        def _stats():
            # Zero-padded lanes contribute exactly 0 to both reductions.
            sum_ref[...] += jnp.sum(acc, axis=1, keepdims=True)
            ssq_ref[...] += jnp.sum(acc * acc, axis=1, keepdims=True)
            # Keep the output buffer deterministic; overwritten in pass 1.
            o_ref[0] = acc.astype(o_ref.dtype)

        @pl.when(p == 1)
        def _apply():
            # Fold BN (train-mode batch stats, biased variance) into one
            # per-channel scale/shift; one dense VPU sweep + ReLU.
            mean = sum_ref[...] * inv_cnt
            var = jnp.maximum(ssq_ref[...] * inv_cnt - mean * mean, 0.0)
            scale = gamma_ref[...] * jax.lax.rsqrt(var + BN_EPS)   # (C_out, 1)
            shift = beta_ref[...] - mean * scale                   # (C_out, 1)
            o_ref[0] = jnp.maximum(acc * scale + shift, 0.0).astype(o_ref.dtype)

    return kernel


def conv_block_single(x_nchw, weight_oihw, gamma, beta):
    """Forward pass of conv_block_single.  x_nchw: (N, C_in, H, W) float32."""
    N, C_in, H, W = x_nchw.shape
    C_out = weight_oihw.shape[0]
    S = H * W

    # Lane-dense spatial axis: round S up to a multiple of 128, then pick a
    # spatial tile TS (multiple of 128) and round S up to a multiple of TS.
    S_r = _round_up(S, 128)
    TS = S_r if S_r <= 2048 else 1024
    S_pad = _round_up(S_r, TS)
    n_tiles = S_pad // TS

    x = x_nchw.astype(jnp.float32)
    # Wrapper-side im2col (review option (a)): 9 taps of the padded input,
    # stacked tap-major then channel -> (N, 9*C_in, S), zero-padded on lanes.
    x_pad = jnp.pad(x, ((0, 0), (0, 0), (1, 1), (1, 1)))
    taps = [x_pad[:, :, kh:kh + H, kw:kw + W]
            for kh in range(3) for kw in range(3)]
    patch = jnp.stack(taps, axis=1).reshape(N, 9 * C_in, S)
    if S_pad != S:
        patch = jnp.pad(patch, ((0, 0), (0, 0), (0, S_pad - S)))

    # OIHW -> (C_out, KH, KW, C_in) -> (C_out, 9*C_in); column ordering matches
    # the patch row ordering (kh, kw, ci).  Tiny tensor, negligible cost.
    w_mat = jnp.transpose(weight_oihw, (0, 2, 3, 1)).reshape(C_out, 9 * C_in)
    w_mat = w_mat.astype(jnp.float32)
    gamma2 = gamma.reshape(C_out, 1).astype(jnp.float32)
    beta2 = beta.reshape(C_out, 1).astype(jnp.float32)

    kernel = _make_kernel(N * S)   # true element count per channel

    out = pl.pallas_call(
        kernel,
        out_shape=jax.ShapeDtypeStruct((N, C_out, S_pad), jnp.float32),
        grid_spec=pltpu.PrefetchScalarGridSpec(
            num_scalar_prefetch=0,
            # (pass, batch, spatial tile) — pass is outermost so all partial
            # stats are accumulated before any tile is normalized.
            grid=(2, N, n_tiles),
            in_specs=[
                pl.BlockSpec((C_out, 9 * C_in), lambda p, n, t: (0, 0)),
                pl.BlockSpec((1, 9 * C_in, TS), lambda p, n, t: (n, 0, t)),
                pl.BlockSpec((C_out, 1), lambda p, n, t: (0, 0)),
                pl.BlockSpec((C_out, 1), lambda p, n, t: (0, 0)),
            ],
            out_specs=pl.BlockSpec((1, C_out, TS), lambda p, n, t: (n, 0, t)),
            scratch_shapes=[
                pltpu.VMEM((C_out, 1), jnp.float32),   # per-channel sum
                pltpu.VMEM((C_out, 1), jnp.float32),   # per-channel sum of squares
            ],
        ),
        compiler_params=pltpu.CompilerParams(
            # All axes sequential: the BN scratch accumulation and the
            # pass-0-before-pass-1 ordering require it (see TODO on v7x).
            dimension_semantics=("arbitrary", "arbitrary", "arbitrary"),
            # Explicit VMEM budget; tile size keeps the double-buffered working
            # set ((9*C_in + C_out) * TS * 4 B * 2) far below this on all gens.
            vmem_limit_bytes=32 * 1024 * 1024,
        ),
    )(w_mat, patch, gamma2, beta2)

    # Slice off the lane padding (if any) and reshape back to NCHW — both are
    # contiguous / transpose-free.
    if S_pad != S:
        out = out[:, :, :S]
    return out.reshape(N, C_out, H, W).astype(x_nchw.dtype)


def _reference(x_nchw, weight_oihw, gamma, beta):
    """Pure-JAX reference: conv2d + train-mode BN + ReLU (for verification)."""
    y = jax.lax.conv_general_dilated(
        x_nchw, weight_oihw,
        window_strides=(1, 1), padding=((1, 1), (1, 1)),
        dimension_numbers=("NCHW", "OIHW", "NCHW"),
    )
    mean = jnp.mean(y, axis=(0, 2, 3), keepdims=True)
    var = jnp.mean((y - mean) ** 2, axis=(0, 2, 3), keepdims=True)
    y = (y - mean) * jax.lax.rsqrt(var + BN_EPS)
    y = y * gamma.reshape(1, -1, 1, 1) + beta.reshape(1, -1, 1, 1)
    return jnp.maximum(y, 0.0)


if __name__ == "__main__":
    # Small shapes consistent with the module: N=2, ch_in=4, ch_out=8, 16x16.
    N, C_IN, C_OUT, H, W = 2, 4, 8, 16, 16

    key = jax.random.PRNGKey(0)
    k_x, k_w, k_g, k_b = jax.random.split(key, 4)

    x = jax.random.normal(k_x, (N, C_IN, H, W), dtype=jnp.float32)
    weight = 0.1 * jax.random.normal(k_w, (C_OUT, C_IN, 3, 3), dtype=jnp.float32)
    gamma = 1.0 + 0.1 * jax.random.normal(k_g, (C_OUT,), dtype=jnp.float32)
    beta = 0.1 * jax.random.normal(k_b, (C_OUT,), dtype=jnp.float32)

    out = conv_block_single(x, weight, gamma, beta)
    out = jax.block_until_ready(out)

    ref = jax.block_until_ready(_reference(x, weight, gamma, beta))
    assert out.shape == (N, C_OUT, H, W)
    assert jnp.allclose(out, ref, atol=1e-4, rtol=1e-4), "mismatch vs reference"

    print("KERNEL_OK")
</pallas_src>

<mosaic_0001>
module attributes {stable_mosaic.version = 11 : i64} {
  func.func @kernel(%arg0: i32, %arg1: i32, %arg2: i32, %arg3: memref<8x36xf32, #tpu.memory_space<vmem>>, %arg4: memref<1x36x256xf32, #tpu.memory_space<vmem>>, %arg5: memref<8x1xf32, #tpu.memory_space<vmem>>, %arg6: memref<8x1xf32, #tpu.memory_space<vmem>>, %arg7: memref<1x8x256xf32, #tpu.memory_space<vmem>>, %arg8: memref<8x1xf32, #tpu.memory_space<vmem>>, %arg9: memref<8x1xf32, #tpu.memory_space<vmem>>) attributes {dimension_semantics = [#tpu.dimension_semantics<arbitrary>, #tpu.dimension_semantics<arbitrary>, #tpu.dimension_semantics<arbitrary>], iteration_bounds = array<i64: 2, 2, 1>, scalar_prefetch = 0 : i64, scratch_operands = 2 : i64, tpu.core_type = #tpu.core_type<tc>, window_params = [{pipeline_mode = #tpu.pipeline_mode<synchronous>, transform_indices = @transform_0, window_bounds = array<i64: 8, 36>}, {transform_indices = @transform_1, window_bounds = array<i64: 1, 36, 256>}, {pipeline_mode = #tpu.pipeline_mode<synchronous>, transform_indices = @transform_2, window_bounds = array<i64: 8, 1>}, {pipeline_mode = #tpu.pipeline_mode<synchronous>, transform_indices = @transform_3, window_bounds = array<i64: 8, 1>}, {transform_indices = @transform_4, window_bounds = array<i64: 1, 8, 256>}]} {
    %c0_i32 = arith.constant 0 : i32
    %0 = arith.cmpi eq, %arg0, %c0_i32 : i32
    %c0_i32_0 = arith.constant 0 : i32
    %1 = arith.cmpi eq, %arg1, %c0_i32_0 : i32
    %2 = arith.andi %0, %1 : i1
    %c0_i32_1 = arith.constant 0 : i32
    %3 = arith.cmpi eq, %arg2, %c0_i32_1 : i32
    %4 = arith.andi %2, %3 : i1
    %5 = arith.extui %4 : i1 to i32
    %c0_i32_2 = arith.constant 0 : i32
    %6 = arith.cmpi ne, %5, %c0_i32_2 : i32
    scf.if %6 {
      %cst_10 = arith.constant 0.000000e+00 : f32
      %17 = vector.broadcast %cst_10 : f32 to vector<8x1xf32>
      %c0_11 = arith.constant 0 : index
      %c0_12 = arith.constant 0 : index
      %18 = vector.load %arg8[%c0_11, %c0_12] : memref<8x1xf32, #tpu.memory_space<vmem>>, vector<8x1xf32>
      tpu.vector_store %arg8[%c0_11, %c0_12], %17 {strides = array<i32>} : memref<8x1xf32, #tpu.memory_space<vmem>>, vector<8x1xf32>,
      %cst_13 = arith.constant 0.000000e+00 : f32
      %19 = vector.broadcast %cst_13 : f32 to vector<8x1xf32>
      %c0_14 = arith.constant 0 : index
      %c0_15 = arith.constant 0 : index
      %20 = vector.load %arg9[%c0_14, %c0_15] : memref<8x1xf32, #tpu.memory_space<vmem>>, vector<8x1xf32>
      tpu.vector_store %arg9[%c0_14, %c0_15], %19 {strides = array<i32>} : memref<8x1xf32, #tpu.memory_space<vmem>>, vector<8x1xf32>,
    } else {
    }
    %c0 = arith.constant 0 : index
    %c0_3 = arith.constant 0 : index
    %7 = vector.load %arg3[%c0, %c0_3] : memref<8x36xf32, #tpu.memory_space<vmem>>, vector<8x36xf32>
    %c0_4 = arith.constant 0 : index
    %c0_5 = arith.constant 0 : index
    %c0_6 = arith.constant 0 : index
    %8 = vector.load %arg4[%c0_4, %c0_5, %c0_6] : memref<1x36x256xf32, #tpu.memory_space<vmem>>, vector<1x36x256xf32>
    %9 = vector.shape_cast %8 : vector<1x36x256xf32> to vector<36x256xf32>
    %cst = arith.constant dense<0.000000e+00> : vector<8x256xf32>
    %10 = tpu.matmul %7, %9, %cst {dimension_numbers = #tpu.dot_dimension_numbers<[1], [0], [0], [1], [0, 0, 1, 1], [], []>} : vector<8x36xf32>, vector<36x256xf32>, vector<8x256xf32> -> vector<8x256xf32>
    %c0_i32_7 = arith.constant 0 : i32
    %11 = arith.cmpi eq, %arg0, %c0_i32_7 : i32
    %12 = arith.extui %11 : i1 to i32
    %c0_i32_8 = arith.constant 0 : i32
    %13 = arith.cmpi ne, %12, %c0_i32_8 : i32
    scf.if %13 {
      %c0_10 = arith.constant 0 : index
      %c0_11 = arith.constant 0 : index
      %17 = vector.load %arg8[%c0_10, %c0_11] : memref<8x1xf32, #tpu.memory_space<vmem>>, vector<8x1xf32>
      %cst_12 = arith.constant dense<0.000000e+00> : vector<8xf32>
      %18 = vector.multi_reduction <add>, %10, %cst_12 [1] : vector<8x256xf32> to vector<8xf32>
      %19 = vector.shape_cast %18 : vector<8xf32> to vector<8x1xf32>
      %20 = arith.addf %17, %19 : vector<8x1xf32>
      %c0_13 = arith.constant 0 : index
      %c0_14 = arith.constant 0 : index
      %21 = vector.load %arg8[%c0_13, %c0_14] : memref<8x1xf32, #tpu.memory_space<vmem>>, vector<8x1xf32>
      tpu.vector_store %arg8[%c0_13, %c0_14], %20 {strides = array<i32>} : memref<8x1xf32, #tpu.memory_space<vmem>>, vector<8x1xf32>,
      %c0_15 = arith.constant 0 : index
      %c0_16 = arith.constant 0 : index
      %22 = vector.load %arg9[%c0_15, %c0_16] : memref<8x1xf32, #tpu.memory_space<vmem>>, vector<8x1xf32>
      %23 = arith.mulf %10, %10 : vector<8x256xf32>
      %cst_17 = arith.constant dense<0.000000e+00> : vector<8xf32>
      %24 = vector.multi_reduction <add>, %23, %cst_17 [1] : vector<8x256xf32> to vector<8xf32>
      %25 = vector.shape_cast %24 : vector<8xf32> to vector<8x1xf32>
      %26 = arith.addf %22, %25 : vector<8x1xf32>
      %c0_18 = arith.constant 0 : index
      %c0_19 = arith.constant 0 : index
      %27 = vector.load %arg9[%c0_18, %c0_19] : memref<8x1xf32, #tpu.memory_space<vmem>>, vector<8x1xf32>
      tpu.vector_store %arg9[%c0_18, %c0_19], %26 {strides = array<i32>} : memref<8x1xf32, #tpu.memory_space<vmem>>, vector<8x1xf32>,
      %c0_20 = arith.constant 0 : index
      %c0_21 = arith.constant 0 : index
      %c0_22 = arith.constant 0 : index
      %28 = vector.load %arg7[%c0_20, %c0_21, %c0_22] : memref<1x8x256xf32, #tpu.memory_space<vmem>>, vector<1x8x256xf32>
      %29 = vector.shape_cast %28 : vector<1x8x256xf32> to vector<8x256xf32>
      %30 = vector.shape_cast %10 : vector<8x256xf32> to vector<1x8x256xf32>
      tpu.vector_store %arg7[%c0_20, %c0_21, %c0_22], %30 {strides = array<i32>} : memref<1x8x256xf32, #tpu.memory_space<vmem>>, vector<1x8x256xf32>,
    } else {
    }
    %c1_i32 = arith.constant 1 : i32
    %14 = arith.cmpi eq, %arg0, %c1_i32 : i32
    %15 = arith.extui %14 : i1 to i32
    %c0_i32_9 = arith.constant 0 : i32
    %16 = arith.cmpi ne, %15, %c0_i32_9 : i32
    scf.if %16 {
      %c0_10 = arith.constant 0 : index
      %c0_11 = arith.constant 0 : index
      %17 = vector.load %arg8[%c0_10, %c0_11] : memref<8x1xf32, #tpu.memory_space<vmem>>, vector<8x1xf32>
      %cst_12 = arith.constant 0.001953125 : f32
      %18 = vector.broadcast %cst_12 : f32 to vector<8x1xf32>
      %19 = arith.mulf %17, %18 : vector<8x1xf32>
      %c0_13 = arith.constant 0 : index
      %c0_14 = arith.constant 0 : index
      %20 = vector.load %arg9[%c0_13, %c0_14] : memref<8x1xf32, #tpu.memory_space<vmem>>, vector<8x1xf32>
      %cst_15 = arith.constant 0.001953125 : f32
      %21 = vector.broadcast %cst_15 : f32 to vector<8x1xf32>
      %22 = arith.mulf %20, %21 : vector<8x1xf32>
      %23 = arith.mulf %19, %19 : vector<8x1xf32>
      %24 = arith.subf %22, %23 : vector<8x1xf32>
      %cst_16 = arith.constant 0.000000e+00 : f32
      %25 = vector.broadcast %cst_16 : f32 to vector<8x1xf32>
      %26 = arith.maximumf %24, %25 : vector<8x1xf32>
      %c0_17 = arith.constant 0 : index
      %c0_18 = arith.constant 0 : index
      %27 = vector.load %arg5[%c0_17, %c0_18] : memref<8x1xf32, #tpu.memory_space<vmem>>, vector<8x1xf32>
      %cst_19 = arith.constant 9.99999974E-6 : f32
      %28 = vector.broadcast %cst_19 : f32 to vector<8x1xf32>
      %29 = arith.addf %26, %28 : vector<8x1xf32>
      %30 = math.rsqrt %29 : vector<8x1xf32>
      %31 = arith.mulf %27, %30 : vector<8x1xf32>
      %c0_20 = arith.constant 0 : index
      %c0_21 = arith.constant 0 : index
      %32 = vector.load %arg6[%c0_20, %c0_21] : memref<8x1xf32, #tpu.memory_space<vmem>>, vector<8x1xf32>
      %33 = arith.mulf %19, %31 : vector<8x1xf32>
      %34 = arith.subf %32, %33 : vector<8x1xf32>
      %35 = vector.broadcast %31 : vector<8x1xf32> to vector<8x256xf32>
      %36 = arith.mulf %10, %35 : vector<8x256xf32>
      %37 = vector.broadcast %34 : vector<8x1xf32> to vector<8x256xf32>
      %38 = arith.addf %36, %37 : vector<8x256xf32>
      %cst_22 = arith.constant 0.000000e+00 : f32
      %39 = vector.broadcast %cst_22 : f32 to vector<8x256xf32>
      %40 = arith.maximumf %38, %39 : vector<8x256xf32>
      %c0_23 = arith.constant 0 : index
      %c0_24 = arith.constant 0 : index
      %c0_25 = arith.constant 0 : index
      %41 = vector.load %arg7[%c0_23, %c0_24, %c0_25] : memref<1x8x256xf32, #tpu.memory_space<vmem>>, vector<1x8x256xf32>
      %42 = vector.shape_cast %41 : vector<1x8x256xf32> to vector<8x256xf32>
      %43 = vector.shape_cast %40 : vector<8x256xf32> to vector<1x8x256xf32>
      tpu.vector_store %arg7[%c0_23, %c0_24, %c0_25], %43 {strides = array<i32>} : memref<1x8x256xf32, #tpu.memory_space<vmem>>, vector<1x8x256xf32>,
    } else {
    }
    return
  }
  func.func @transform_0(%arg0: i32, %arg1: i32, %arg2: i32) -> (i32, i32) {
    %c0_i32 = arith.constant 0 : i32
    %c0_i32_0 = arith.constant 0 : i32
    %c0_i32_1 = arith.constant 0 : i32
    return %c0_i32, %c0_i32_0 : i32, i32
  }
  func.func @transform_1(%arg0: i32, %arg1: i32, %arg2: i32) -> (i32, i32, i32) {
    %c0_i32 = arith.constant 0 : i32
    %c0_i32_0 = arith.constant 0 : i32
    return %arg1, %c0_i32, %arg2 : i32, i32, i32
  }
  func.func @transform_2(%arg0: i32, %arg1: i32, %arg2: i32) -> (i32, i32) {
    %c0_i32 = arith.constant 0 : i32
    %c0_i32_0 = arith.constant 0 : i32
    %c0_i32_1 = arith.constant 0 : i32
    return %c0_i32, %c0_i32_0 : i32, i32
  }
  func.func @transform_3(%arg0: i32, %arg1: i32, %arg2: i32) -> (i32, i32) {
    %c0_i32 = arith.constant 0 : i32
    %c0_i32_0 = arith.constant 0 : i32
    %c0_i32_1 = arith.constant 0 : i32
    return %c0_i32, %c0_i32_0 : i32, i32
  }
  func.func @transform_4(%arg0: i32, %arg1: i32, %arg2: i32) -> (i32, i32, i32) {
    %c0_i32 = arith.constant 0 : i32
    %c0_i32_0 = arith.constant 0 : i32
    return %arg1, %c0_i32, %arg2 : i32, i32, i32
  }
}

</mosaic_0001>

<llo_original>
// kernel: tpu_custom_call.1
$region0: #{tpu_custom_call.1}
  #allocation0 [shape = 'u32[]', space=smem, size = 0x4, offset = 0x4, fixed_abs, tag = 'smem constant byte address 0x4 - core index']
  #allocation1 [shape = 'u32[144,128]{1,0:T(1,128)}', space=vmem, size = 0x12000, scoped, tag = 'internal scratch']
  #allocation2 [shape = 'f32[8,1]{1,0:T(8,128)}', space=vmem, size = 0x1000, scoped, tag = 'scratch operand']
  #allocation3 [shape = 'f32[8,1]{1,0:T(8,128)}', space=vmem, size = 0x1000, scoped, tag = 'scratch operand']
  %s0 = inlined_call_operand.vmem [shape: f32[8,36], index: 0, kind: input, shape index: {}]
  %s1 = inlined_call_operand.vmem [shape: f32[2,36,256], index: 1, kind: input, shape index: {}]
  %s2 = inlined_call_operand.vmem [shape: f32[8,1], index: 2, kind: input, shape index: {}]
  %s3 = inlined_call_operand.vmem [shape: f32[8,1], index: 3, kind: input, shape index: {}]
  %s4 = inlined_call_operand.hbm [shape: f32[2,8,256], index: 4, kind: output, shape index: {}]
  %s5 = sld [smem:[#allocation0]]
  $region61: #{tpu_custom_call.1} parent=0
    _
  %s7 = ssub.s32 1, %s5
  %s8 = scalar_select 0, %s7, %s5
  $region1: #{tpu_custom_call.1} parent=0
    #allocation4 [shape = 'u8[16384]{0}', space=vmem, size = 0x4000, scoped, tag = 'output window, operand 0']
    #allocation5 [shape = 's32[2]{0}', space=sflag, size = 0x8, scoped, tag = 'scoped memory for tpu_custom_call.1']
    %9 = vsyncpa [#allocation5], 0
    %s10 = scalar_lea.sflag [#allocation5], 1
    %11 = vsyncpa %s10, 0
    loop: start=0, step=1, limit=6
    $region2: #{tpu_custom_call.1} parent=1 // loop_pre_header
      _
    $region3: #{tpu_custom_call.1} parent=1 // loop_header
      %s13 = sphi 0, %s17
      %p14 = scmp.ge.s32.totalorder %s13, 6
      %s20 = sphi 0, %s39
      %s21 = sphi 0, %s35
      %s22 = sphi 0, %s31
      %s23 = sphi 0, %s20
      %s24 = sphi 0, %s21
      %s25 = sphi 0, %s22
      %s26 = sphi 0, %s23
      %s27 = sphi 0, %s24
      %s28 = sphi 0, %s25
      %s40 = sphi 0, %s40
      %s42 = sphi 0, %s40
      %s43 = sphi 0, %s42
      %s57 = sphi 0, %s43
      %s65 = sphi 0, %s67
      %s68 = sphi 0, %s65
      %s69 = sphi 0, %s68
      %s85 = sphi 0, %s69
      %s89 = sphi 0, %s89
      %s91 = sphi 0, %s89
      %s92 = sphi 0, %s91
      %s106 = sphi 0, %s92
      %s110 = sphi 0, %s110
      %s112 = sphi 0, %s110
      %s113 = sphi 0, %s112
      %s127 = sphi 0, %s113
      %s135 = sphi 0, %s137
      %s138 = sphi 0, %s135
      %s139 = sphi 0, %s138
      %s155 = sphi 0, %s139
    $region4: #{tpu_custom_call.1} parent=1 // loop_header_branch
      %16 = sbr.rel (%p14) target = $region8
    $region5: #{tpu_custom_call.1} parent=1 // loop_body
      %s18 = ssub.s32 %s13, 1
      %s19 = ssub.s32 %s13, 2
      %s29 = sadd.s32 1, %s22
      %p30 = scmp.ge.s32.totalorder %s29, 1
      %s31 = scalar_select %p30, 0, %s29
      %s32 = sadd.s32 1, %s21
      %s33 = scalar_select %p30, %s32, %s21
      %p34 = scmp.ge.s32.totalorder %s33, 2
      %s35 = scalar_select %p34, 0, %s33
      %s36 = sadd.s32 1, %s20
      %s37 = scalar_select %p34, %s36, %s20
      %p38 = scmp.ge.s32.totalorder %s37, 2
      %s39 = scalar_select %p38, 0, %s37
      %s41 = sadd.s32 %s40, 1
      %p44 = scmp.eq.s32.totalorder %s13, 3
      %p45 = scmp.ne.s32.totalorder %s40, %s42
      %p46 = scmp.eq.s32.totalorder %s13, 0
      %p47 = por %p45, %p46
      %p48 = scmp.ne.s32.totalorder %s40, %s42
      %p49 = scmp.eq.s32.totalorder %s18, 3
      %p50 = por %p48, %p49
      %p51 = scmp.ne.s32.totalorder %s42, %s43
      %p52 = scmp.eq.s32.totalorder %s18, 0
      %p53 = por %p51, %p52
      %p54 = scmp.ne.s32.totalorder %s42, %s43
      %p55 = scmp.eq.s32.totalorder %s19, 3
      %p56 = por %p54, %p55
      %p58 = scmp.ne.s32.totalorder %s43, %s57
      %p59 = scmp.eq.s32.totalorder %s19, 0
      %p60 = por %p58, %p59
      %s61 = ssub.s32 %s21, %s35
      %s62 = ssub.s32 %s22, %s31
      %s63 = sor.u32 %s61, %s62
      %p64 = scmp.eq.s32.totalorder %s63, 0
      %s66 = sadd.s32 %s65, 1
      %s67 = scalar_select %p64, %s65, %s66
      %p70 = pneg %p64
      %p71 = scmp.eq.s32.totalorder %s13, 3
      %p72 = por %p70, %p71
      %p73 = scmp.ne.s32.totalorder %s65, %s68
      %p74 = scmp.eq.s32.totalorder %s13, 0
      %p75 = por %p73, %p74
      %p76 = scmp.ne.s32.totalorder %s65, %s68
      %p77 = scmp.eq.s32.totalorder %s18, 3
      %p78 = por %p76, %p77
      %p79 = scmp.ne.s32.totalorder %s68, %s69
      %p80 = scmp.eq.s32.totalorder %s18, 0
      %p81 = por %p79, %p80
      %p82 = scmp.ne.s32.totalorder %s68, %s69
      %p83 = scmp.eq.s32.totalorder %s19, 3
      %p84 = por %p82, %p83
      %p86 = scmp.ne.s32.totalorder %s69, %s85
      %p87 = scmp.eq.s32.totalorder %s19, 0
      %p88 = por %p86, %p87
      %s90 = sadd.s32 %s89, 1
      %p93 = scmp.eq.s32.totalorder %s13, 3
      %p94 = scmp.ne.s32.totalorder %s89, %s91
      %p95 = scmp.eq.s32.totalorder %s13, 0
      %p96 = por %p94, %p95
      %p97 = scmp.ne.s32.totalorder %s89, %s91
      %p98 = scmp.eq.s32.totalorder %s18, 3
      %p99 = por %p97, %p98
      %p100 = scmp.ne.s32.totalorder %s91, %s92
      %p101 = scmp.eq.s32.totalorder %s18, 0
      %p102 = por %p100, %p101
      %p103 = scmp.ne.s32.totalorder %s91, %s92
      %p104 = scmp.eq.s32.totalorder %s19, 3
      %p105 = por %p103, %p104
      %p107 = scmp.ne.s32.totalorder %s92, %s106
      %p108 = scmp.eq.s32.totalorder %s19, 0
      %p109 = por %p107, %p108
      %s111 = sadd.s32 %s110, 1
      %p114 = scmp.eq.s32.totalorder %s13, 3
      %p115 = scmp.ne.s32.totalorder %s110, %s112
      %p116 = scmp.eq.s32.totalorder %s13, 0
      %p117 = por %p115, %p116
      %p118 = scmp.ne.s32.totalorder %s110, %s112
      %p119 = scmp.eq.s32.totalorder %s18, 3
      %p120 = por %p118, %p119
      %p121 = scmp.ne.s32.totalorder %s112, %s113
      %p122 = scmp.eq.s32.totalorder %s18, 0
      %p123 = por %p121, %p122
      %p124 = scmp.ne.s32.totalorder %s112, %s113
      %p125 = scmp.eq.s32.totalorder %s19, 3
      %p126 = por %p124, %p125
      %p128 = scmp.ne.s32.totalorder %s113, %s127
      %p129 = scmp.eq.s32.totalorder %s19, 0
      %p130 = por %p128, %p129
      %s131 = ssub.s32 %s21, %s35
      %s132 = ssub.s32 %s22, %s31
      %s133 = sor.u32 %s131, %s132
      %p134 = scmp.eq.s32.totalorder %s133, 0
      %s136 = sadd.s32 %s135, 1
      %s137 = scalar_select %p134, %s135, %s136
      %p140 = pneg %p134
      %p141 = scmp.eq.s32.totalorder %s13, 3
      %p142 = por %p140, %p141
      %p143 = scmp.ne.s32.totalorder %s135, %s138
      %p144 = scmp.eq.s32.totalorder %s13, 0
      %p145 = por %p143, %p144
      %p146 = scmp.ne.s32.totalorder %s135, %s138
      %p147 = scmp.eq.s32.totalorder %s18, 3
      %p148 = por %p146, %p147
      %p149 = scmp.ne.s32.totalorder %s138, %s139
      %p150 = scmp.eq.s32.totalorder %s18, 0
      %p151 = por %p149, %p150
      %p152 = scmp.ne.s32.totalorder %s138, %s139
      %p153 = scmp.eq.s32.totalorder %s19, 3
      %p154 = por %p152, %p153
      %p156 = scmp.ne.s32.totalorder %s139, %s155
      %p157 = scmp.eq.s32.totalorder %s19, 0
      %p158 = por %p156, %p157
      %p159 = scmp.le.s32.totalorder 1, %s13
      %p160 = scmp.lt.s32.totalorder %s13, 5
      %p161 = pnand %p159, %p160
      %p162 = pneg %p161
      // Predicated region
      $region9: #{tpu_custom_call.1} parent=5 // pred_check
        _
      $region10: #{tpu_custom_call.1} parent=5 // pred_check_branch
        %164 = sbr.rel (%p161) target = $region12
      $region11: #{tpu_custom_call.1} parent=5 // pred_region
        %s165 = ssub.s32 %s13, 1
        // Predicated region
        $region13: #{tpu_custom_call.1} parent=11 // pred_check
          %p166 = pneg %p53
        $region14: #{tpu_custom_call.1} parent=11 // pred_check_branch
          %168 = sbr.rel (%p166) target = $region16
        $region15: #{tpu_custom_call.1} parent=11 // pred_region
          _
        $region16: #{tpu_custom_call.1} parent=11 // pred_fallthru
          _
        // Predicated region
        $region17: #{tpu_custom_call.1} parent=11 // pred_check
          %p169 = pneg %p102
        $region18: #{tpu_custom_call.1} parent=11 // pred_check_branch
          %171 = sbr.rel (%p169) target = $region20
        $region19: #{tpu_custom_call.1} parent=11 // pred_region
          _
        $region20: #{tpu_custom_call.1} parent=11 // pred_fallthru
          _
        // Predicated region
        $region21: #{tpu_custom_call.1} parent=11 // pred_check
          %p172 = pneg %p123
        $region22: #{tpu_custom_call.1} parent=11 // pred_check_branch
          %174 = sbr.rel (%p172) target = $region24
        $region23: #{tpu_custom_call.1} parent=11 // pred_region
          _
        $region24: #{tpu_custom_call.1} parent=11 // pred_fallthru
          _
      $region12: #{tpu_custom_call.1} parent=5 // pred_fallthru
        _
      %p175 = scmp.lt.s32.totalorder %s13, 4
      // Predicated region
      $region25: #{tpu_custom_call.1} parent=5 // pred_check
        %p176 = pneg %p175
      $region26: #{tpu_custom_call.1} parent=5 // pred_check_branch
        %178 = sbr.rel (%p176) target = $region28
      $region27: #{tpu_custom_call.1} parent=5 // pred_region
        // Predicated region
        $region29: #{tpu_custom_call.1} parent=27 // pred_check
          %p179 = pneg %p75
        $region30: #{tpu_custom_call.1} parent=27 // pred_check_branch
          %181 = sbr.rel (%p179) target = $region32
        $region31: #{tpu_custom_call.1} parent=27 // pred_region
          %s182 = smul.u32 2, %s22
          %p183 = scmp.lt.s32.totalorder %s21, 1
          %s184 = scalar_select %p183, %s21, 1
          %p185 = scmp.lt.s32.totalorder %s182, 1
          %s186 = scalar_select %p185, %s182, 1
          %s187 = smul.addr %s184, 10
          %s188 = sadd.s32 %s186, %s187
          %s189 = smul.addr %s188, 8
          %s190 = scalar_lea.vmem %s1, %s189
          %s191 = smul.u32 2, %s22
        $region32: #{tpu_custom_call.1} parent=27 // pred_fallthru
          _
      $region28: #{tpu_custom_call.1} parent=5 // pred_fallthru
        _
      %p192 = scmp.le.s32.totalorder 1, %s13
      %p193 = scmp.lt.s32.totalorder %s13, 5
      %p194 = pnand %p192, %p193
      %p195 = pneg %p194
      // Predicated region
      $region33: #{tpu_custom_call.1} parent=5 // pred_check
        _
      $region34: #{tpu_custom_call.1} parent=5 // pred_check_branch
        %197 = sbr.rel (%p194) target = $region36
      $region35: #{tpu_custom_call.1} parent=5 // pred_region
        %s198 = ssub.s32 %s13, 1
        %p199 = pneg %p53
        %p200 = pneg %p50
        %s201 = smul.u32 2, %s25
        %p202 = scmp.lt.s32.totalorder %s24, 1
        %s203 = scalar_select %p202, %s24, 1
        %p204 = scmp.lt.s32.totalorder %s201, 1
        %s205 = scalar_select %p204, %s201, 1
        %s206 = smul.addr %s203, 10
        %s207 = sadd.s32 %s205, %s206
        %s208 = smul.addr %s207, 8
        %s209 = scalar_lea.vmem %s1, %s208
        %p210 = pneg %p81
        %p211 = pneg %p78
        %p212 = pneg %p102
        %p213 = pneg %p99
        %p214 = pneg %p123
        %p215 = pneg %p120
        %p216 = pneg %p151
        %p217 = pneg %p148
        %s218 = sand.u32 %s138, 1
        %s219 = scalar_lea.sflag [#allocation5], %s218
        %s220 = sand.u32 %s138, 1
        %s221 = smul.addr %s220, 16
        %s222 = scalar_lea.vmem [#allocation4], %s221
        %s223 = smul.u32 2, %s25
        %p224 = scmp.lt.s32.totalorder %s24, 1
        %s225 = scalar_select %p224, %s24, 1
        %p226 = scmp.lt.s32.totalorder %s223, 1
        %s227 = scalar_select %p226, %s223, 1
        %s228 = smul.addr %s225, 10
        %s229 = sadd.s32 %s227, %s228
        %s230 = smul.addr %s229, 8
        %s231 = scalar_lea.vmem %s1, %s230
        %s232 = smul.u32 2, %s25
        %s233 = smul.u32 2, %s25
        %p234 = scmp.eq.s32.totalorder %s23, 0
        %p235 = scmp.eq.s32.totalorder %s24, 0
        %p236 = pnand %p234, %p235
        %p237 = pneg %p236
        %p238 = scmp.eq.s32.totalorder %s25, 0
        %p239 = pnand %p237, %p238
        %p240 = pneg %p239
        // Predicated region
        $region37: #{tpu_custom_call.1} parent=35 // pred_check
          _
        $region38: #{tpu_custom_call.1} parent=35 // pred_check_branch
          %242 = sbr.rel (%p239) target = $region40
        $region39: #{tpu_custom_call.1} parent=35 // pred_region
          %vm243 = vcmask 7168
          %244 = vst.msk [vmem:[#allocation2] sm:$0xff] %vm243, 0.0
          %245 = vst.msk [vmem:[#allocation3] sm:$0xff] %vm243, 0.0
        $region40: #{tpu_custom_call.1} parent=35 // pred_fallthru
          _
        %v246 = vld [vmem:[%s0] sm:$0xff]
        %v247 = vld [vmem:[%s231] sm:$0xff]
        %v248 = vld [vmem:[%s231 + $0x8] sm:$0xff]
        %v249 = vld [vmem:[%s231 + $0x10] sm:$0xff]
        %v250 = vld [vmem:[%s231 + $0x18] sm:$0xff]
        %v251 = vld [vmem:[%s231 + $0x20] sm:$0xff]
        %v252 = vld [vmem:[%s231 + $0x28] sm:$0xff]
        %v253 = vld [vmem:[%s231 + $0x30] sm:$0xff]
        %v254 = vld [vmem:[%s231 + $0x38] sm:$0xff]
        %v255 = vld [vmem:[%s231 + $0x40] sm:$0xf]
        %v256 = vld [vmem:[%s231 + $0x48] sm:$0xf]
        %vm257 = vcmask 293888
        %v259 = vsel %vm257, %v246, 0
        %vm261 = vcmask 1043456
        %v263 = vsel %vm261, %v255, 0
        %v266 = vsel %vm261, %v256, 0
        %268 = vmatprep.subr.mxu0 %v248
        %269 = vmatpush1.msra.mxu0 %v247
        %270 = vmatprep.subr.mxu0 %v250
        %271 = vmatpush1.msra.mxu0 %v249
        %272 = vmatprep.subr.mxu0 %v252
        %273 = vmatpush1.msra.mxu0 %v251
        %274 = vmatprep.subr.mxu0 %v254
        %275 = vmatpush1.msra.mxu0 %v253
        %276 = vmatprep.subr.mxu0 %v266
        %277 = vmatpush1.msra.mxu0 %v263
        %278 = vmatprep.subr.mxu0 0.0
        %279 = vmatpush1.msra.mxu0 0.0
        %280 = vmatprep.subr.mxu0 0.0
        %281 = vmatpush1.msra.mxu0 0.0
        %282 = vmatprep.subr.mxu0 0.0
        %283 = vmatpush1.msra.mxu0 0.0
        %284 = vmatprep.subr.mxu0 0.0
        %285 = vmatpush1.msra.mxu0 0.0
        %286 = vmatprep.subr.mxu0 0.0
        %287 = vmatpush1.msra.mxu0 0.0
        %288 = vmatprep.subr.mxu0 0.0
        %289 = vmatpush1.msra.mxu0 0.0
        %290 = vmatprep.subr.mxu0 0.0
        %291 = vmatpush1.msra.mxu0 0.0
        %292 = vmatprep.subr.mxu0 0.0
        %293 = vmatpush1.msra.mxu0 0.0
        %294 = vmatprep.subr.mxu0 0.0
        %295 = vmatpush1.msra.mxu0 0.0
        %296 = vmatprep.subr.mxu0 0.0
        %297 = vmatpush1.msra.mxu0 0.0
        %298 = vmatprep.subr.mxu0 0.0
        %299 = vmatpush1.msra.mxu0 0.0
        %300 = vmatprep.subr.mxu0 0.0
        %301 = vmatpush1.msra.mxu0 0.0
        %302 = vmatprep.subr.mxu0 0.0
        %303 = vmatpush1.msra.mxu0 0.0
        %304 = vmatprep.subr.mxu0 0.0
        %305 = vmatpush1.msra.mxu0 0.0
        %306 = vmatprep.subr.mxu0 0.0
        %307 = vmatpush1.msra.mxu0 0.0
        %308 = vmatprep.subr.mxu0 0.0
        %309 = vmatpush1.msra.mxu0 0.0
        %310 = vmatprep.subr.mxu0 0.0
        %311 = vmatpush1.msra.mxu0 0.0
        %312 = vmatprep.subr.mxu0 0.0
        %313 = vmatpush1.msra.mxu0 0.0
        %314 = vmatprep.subr.mxu0 0.0
        %315 = vmatpush1.msra.mxu0 0.0
        %316 = vmatprep.subr.mxu0 0.0
        %317 = vmatpush1.msra.mxu0 0.0
        %318 = vmatprep.subr.mxu0 0.0
        %319 = vmatpush1.msra.mxu0 0.0
        %320 = vmatprep.subr.mxu0 0.0
        %321 = vmatpush1.msra.mxu0 0.0
        %322 = vmatprep.subr.mxu0 0.0
        %323 = vmatpush1.msra.mxu0 0.0
        %324 = vmatprep.subr.mxu0 0.0
        %325 = vmatpush1.msra.mxu0 0.0
        %326 = vmatprep.subr.mxu0 0.0
        %327 = vmatpush1.msra.mxu0 0.0
        %328 = vmatprep.subr.mxu0 0.0
        %329 = vmatpush1.msra.mxu0 0.0
        %330 = vmatprep.subr.mxu0 0.0
        %331 = vmatpush1.msra.mxu0 0.0
        %332 = vmatprep.mubr.f32.mxu0 0.0
        %333 = vmatmul.mubr.f32.gmra.mrb[0].mxu0 %v259
        %v334 = vpop.f32.mrb[0].mxu0
        %v335 = vadd.f32 0.0, %v334
        %v336 = vpop.f32.mrb[0].mxu0
        %v337 = vadd.f32 0.0, %v336
        %338 = vdwg.mxu0
        // Predicated region
        $region41: #{tpu_custom_call.1} parent=35 // pred_check
          %p339 = pneg %p234
        $region42: #{tpu_custom_call.1} parent=35 // pred_check_branch
          %341 = sbr.rel (%p339) target = $region44
        $region43: #{tpu_custom_call.1} parent=35 // pred_region
          %v342 = vld [vmem:[#allocation2] sm:$0xff]
          %v343 = vadd.f32 %v335, %v337
          %344 = vadd.xlane.f32.xlu0 %v343
          %v345 = vpop.xlane.xlu0 %344
          %v346 = vadd.f32 %v342, %v345
          %vm347 = vcmask 7168
          %348 = vst.msk [vmem:[#allocation2] sm:$0xff] %vm347, %v346
          %v349 = vld [vmem:[#allocation3] sm:$0xff]
          %v350 = vmul.f32 %v335, %v335
          %v351 = vmul.f32 %v337, %v337
          %v352 = vadd.f32 %v350, %v351
          %353 = vadd.xlane.f32.xlu0 %v352
          %v354 = vpop.xlane.xlu0 %353
          %v355 = vadd.f32 %v349, %v354
          %356 = vst.msk [vmem:[#allocation3] sm:$0xff] %vm347, %v355
          %357 = vst [vmem:[%s222] sm:$0xff] %v335
          %358 = vst [vmem:[%s222 + $0x8] sm:$0xff] %v337
        $region44: #{tpu_custom_call.1} parent=35 // pred_fallthru
          _
        %p359 = scmp.eq.s32.totalorder %s23, 1
        // Predicated region
        $region45: #{tpu_custom_call.1} parent=35 // pred_check
          %p360 = pneg %p359
        $region46: #{tpu_custom_call.1} parent=35 // pred_check_branch
          %362 = sbr.rel (%p360) target = $region48
        $region47: #{tpu_custom_call.1} parent=35 // pred_region
          %v363 = vld [vmem:[#allocation2] sm:$0xff]
          %v364 = vmul.f32 %v363, 0.001953125
          %v365 = vld [vmem:[#allocation3] sm:$0xff]
          %v366 = vmul.f32 %v365, 0.001953125
          %v367 = vmul.f32 %v364, %v364
          %v368 = vsub.f32 %v366, %v367
          %v369 = vmax.f32 %v368, 0.0
          %v370 = vld [vmem:[%s2] sm:$0xff]
          %v371 = vadd.f32 %v369, 1e-05
          %v372 = vrsqrt.pop %v371
          %v373 = vmul.f32 %v370, %v372
          %v374 = vld [vmem:[%s3] sm:$0xff]
          %v375 = vmul.f32 %v364, %v373
          %v376 = vsub.f32 %v374, %v375
          %378 = vset.pattern.permute.xlu0 0
          %379 = vperm.xlu0 %378, %v373
          %v380 = vpop.permute.xlu0 %379
          %v382 = vmul.f32 %v335, %v380
          %v383 = vmul.f32 %v337, %v380
          %385 = vset.pattern.permute.xlu0 0
          %386 = vperm.xlu0 %385, %v376
          %v387 = vpop.permute.xlu0 %386
          %v389 = vadd.f32 %v382, %v387
          %v390 = vadd.f32 %v383, %v387
          %v391 = vmax.f32 %v389, 0.0
          %v392 = vmax.f32 %v390, 0.0
          %393 = vst [vmem:[%s222] sm:$0xff] %v391
          %394 = vst [vmem:[%s222 + $0x8] sm:$0xff] %v392
        $region48: #{tpu_custom_call.1} parent=35 // pred_fallthru
          _
        %s395 = sand.u32 %s138, 1
        %s396 = scalar_lea.sflag [#allocation5], %s395
        %s397 = sand.u32 %s138, 1
        %s398 = smul.addr %s397, 16
        %s399 = scalar_lea.vmem [#allocation4], %s398
        // Predicated region
        $region49: #{tpu_custom_call.1} parent=35 // pred_check
          %p400 = pneg %p148
        $region50: #{tpu_custom_call.1} parent=35 // pred_check_branch
          %402 = sbr.rel (%p400) target = $region52
        $region51: #{tpu_custom_call.1} parent=35 // pred_region
          %s403 = smul.u32 2, %s25
          %s405 = ssub.s32 256, 256
          %406 = vsyncadd %s396, %s405
          %s407 = smul.addr %s24, 2
          %s408 = sadd.s32 %s403, %s407
          %s409 = smul.addr %s408, 128
          %s410 = scalar_lea.hbm %s4, %s409
          %s412 = sshll.u32 %s399, 4
          %s413 = int_to_ptr.vmem [resolvable:$true] %s412
          %415 = dma.vmem_to_hbm [thread:$0]  %s413, 256, %s410, %s396
        $region52: #{tpu_custom_call.1} parent=35 // pred_fallthru
          _
      $region36: #{tpu_custom_call.1} parent=5 // pred_fallthru
        _
      %p416 = scmp.le.s32.totalorder 2, %s13
      // Predicated region
      $region53: #{tpu_custom_call.1} parent=5 // pred_check
        %p417 = pneg %p416
      $region54: #{tpu_custom_call.1} parent=5 // pred_check_branch
        %419 = sbr.rel (%p417) target = $region56
      $region55: #{tpu_custom_call.1} parent=5 // pred_region
        %s420 = ssub.s32 %s13, 2
        // Predicated region
        $region57: #{tpu_custom_call.1} parent=55 // pred_check
          %p421 = pneg %p154
        $region58: #{tpu_custom_call.1} parent=55 // pred_check_branch
          %423 = sbr.rel (%p421) target = $region60
        $region59: #{tpu_custom_call.1} parent=55 // pred_region
          %s424 = sand.u32 %s139, 1
          %s425 = scalar_lea.sflag [#allocation5], %s424
          %s426 = sand.u32 %s139, 1
          %s427 = smul.addr %s426, 16
          %s428 = scalar_lea.vmem [#allocation4], %s427
          %429 = dma.done %s425, 256
        $region60: #{tpu_custom_call.1} parent=55 // pred_fallthru
          _
      $region56: #{tpu_custom_call.1} parent=5 // pred_fallthru
        _
    $region6: #{tpu_custom_call.1} parent=1 // loop_footer
      %s17 = sadd.s32 1, %s13
    $region7: #{tpu_custom_call.1} parent=1 // loop_footer_branch
      %12 = sbr.rel target = $region3
    $region8: #{tpu_custom_call.1} parent=1 // loop_exit
      _
    %430 = vsyncpa [#allocation5], 1
    %s431 = scalar_lea.sflag [#allocation5], 1
    %432 = vsyncpa %s431, 1

</llo_original>
